<compile_context>
chip_gen: v6e
topology: v6e:2x2x1
jax: 0.10.0
libtpu: 0.0.40
codegen_flags: <defaults>
</compile_context>

<pallas_src>
import jax
import jax.numpy as jnp
from jax import lax
from jax.experimental import pallas as pl
from jax.experimental.pallas import tpu as pltpu

C_IN = 64
C_OUT = 7
C_OUT_PAD = 8                 # pad sublane axis to a full vreg group (8 sublanes)
K = 3
L_IN = 167
L_OUT = L_IN - K + 1          # 165
L_PAD = 256                   # lane-dense padded length (multiple of 128)
INV_SQRT2 = 0.7071067811865476

# pltpu.roll is circular: for tap k the first k lanes wrap to lanes >= L_PAD - k.
# They must land in the discarded padded region, i.e. beyond the valid output window.
assert L_OUT <= L_PAD - (K - 1), "roll wrap-around would corrupt valid output lanes"


def conv1d_gelu_kernel(x_ref, w_ref, o_ref, xpad_ref):
    # x_ref:   (C_IN, L_IN)           = (64, 167)   (leading batch dim squeezed)
    # w_ref:   (K*C_OUT_PAD, C_IN)    = (24, 64)    tap k at sublane rows [8k, 8k+8)
    # o_ref:   (C_OUT, L_OUT)         = (7, 165)    (leading batch dim squeezed)
    # xpad_ref: VMEM scratch (C_IN, L_PAD) = (64, 256)

    # In-kernel zero pad of the length axis (a handful of VMEM vector stores).
    xpad_ref[...] = jnp.zeros_like(xpad_ref)
    xpad_ref[:, :L_IN] = x_ref[...]

    # Single fused MXU issue for all 3 taps: (24, 64) @ (64, 256) -> (24, 256), f32 acc.
    r = jnp.dot(
        w_ref[...], xpad_ref[...],
        preferred_element_type=jnp.float32,
        precision=lax.Precision.HIGHEST,
    )

    # Tap k lives at sublane rows [8k, 8k+8) (tile-aligned slices, no relayout).
    # Circular left-shift by k lanes (== jnp.roll by -k): output column j picks up
    # the tap-k contribution from input column j + k. Wrapped lanes fall in the
    # discarded padded region (asserted above).
    acc = (r[0:8]
           + pltpu.roll(r[8:16], shift=L_PAD - 1, axis=1)
           + pltpu.roll(r[16:24], shift=L_PAD - 2, axis=1))

    # Fused exact-GELU epilogue: 0.5 * v * (1 + erf(v / sqrt(2))).
    # (lax.erf is a VALU polynomial; at 8x256 elements it is irrelevant.)
    v = 0.5 * acc * (lax.erf(acc * INV_SQRT2) + 1.0)

    # Masked store of just the valid window (~14 partial vregs, negligible).
    o_ref[...] = v[:C_OUT, :L_OUT].astype(o_ref.dtype)


def prepare_weight_slab(w):
    """(C_OUT, C_IN, K) -> (K*C_OUT_PAD, C_IN) stacked LHS; tap k at rows [8k, 8k+8).

    Built once outside the hot path (weights are static in the module)."""
    slab = jnp.zeros((K * C_OUT_PAD, C_IN), w.dtype)
    for k in range(K):
        slab = slab.at[k * C_OUT_PAD:k * C_OUT_PAD + C_OUT, :].set(w[:, :, k])
    return slab


_COST = pl.CostEstimate(
    flops=2 * (K * C_OUT_PAD) * C_IN * L_PAD,                 # ~0.8 MFLOP
    transcendentals=C_OUT_PAD * L_PAD,                        # erf lanes
    bytes_accessed=4 * (C_IN * L_IN + K * C_OUT_PAD * C_IN + C_OUT * L_OUT),
)


@jax.jit
def conv1d_gelu(x, w_slab):
    """x: (1, C_IN, L_IN) f32, w_slab: (K*C_OUT_PAD, C_IN) f32 -> (1, C_OUT, L_OUT)."""
    return pl.pallas_call(
        conv1d_gelu_kernel,
        out_shape=jax.ShapeDtypeStruct((1, C_OUT, L_OUT), jnp.float32),
        in_specs=[
            # Full-array blocks (block == full array dims satisfies the (8,128) rule);
            # leading batch dim squeezed out of the kernel view.
            pl.BlockSpec((None, C_IN, L_IN), lambda: (0, 0, 0)),
            pl.BlockSpec((K * C_OUT_PAD, C_IN), lambda: (0, 0)),
        ],
        out_specs=pl.BlockSpec((None, C_OUT, L_OUT), lambda: (0, 0, 0)),
        scratch_shapes=[pltpu.VMEM((C_IN, L_PAD), jnp.float32)],
        cost_estimate=_COST,
    )(x, w_slab)


def reference(x, w):
    """Pure-JAX reference for validation."""
    v1 = lax.conv_general_dilated(
        x, w, window_strides=(1,), padding="VALID",
        dimension_numbers=("NCH", "OIH", "NCH"),
        precision=lax.Precision.HIGHEST)
    return 0.5 * v1 * (lax.erf(v1 * INV_SQRT2) + 1.0)


if __name__ == "__main__":
    key = jax.random.PRNGKey(0)
    x1 = jax.random.normal(key, (1, C_IN, L_IN), dtype=jnp.float32)
    # Deterministic weight matching torch.ones(7, 64, 3)
    w = jnp.ones((C_OUT, C_IN, K), dtype=jnp.float32)

    w_slab = prepare_weight_slab(w)          # static: built once, reused per call

    out = conv1d_gelu(x1, w_slab)
    jax.block_until_ready(out)

    ref = reference(x1, w)
    assert out.shape == (1, C_OUT, L_OUT)
    assert jnp.allclose(out, ref, atol=1e-3, rtol=1e-3), float(jnp.max(jnp.abs(out - ref)))

    print("KERNEL_OK")
</pallas_src>

<mosaic_0001>
module attributes {stable_mosaic.version = 11 : i64} {
  func.func @conv1d_gelu_kernel(%arg0: memref<1x64x167xf32, #tpu.memory_space<vmem>>, %arg1: memref<24x64xf32, #tpu.memory_space<vmem>>, %arg2: memref<1x7x165xf32, #tpu.memory_space<vmem>>, %arg3: memref<64x256xf32, #tpu.memory_space<vmem>>) attributes {dimension_semantics = [], scalar_prefetch = 0 : i64, scratch_operands = 1 : i64, tpu.core_type = #tpu.core_type<tc>} {
    %cst = arith.constant 0.000000e+00 : f32
    %0 = vector.broadcast %cst : f32 to vector<64x256xf32>
    %c0 = arith.constant 0 : index
    %c0_0 = arith.constant 0 : index
    %1 = vector.load %arg3[%c0, %c0_0] : memref<64x256xf32, #tpu.memory_space<vmem>>, vector<64x256xf32>
    tpu.vector_store %arg3[%c0, %c0_0], %0 {strides = array<i32>} : memref<64x256xf32, #tpu.memory_space<vmem>>, vector<64x256xf32>,
    %c0_1 = arith.constant 0 : index
    %c0_2 = arith.constant 0 : index
    %c0_3 = arith.constant 0 : index
    %2 = vector.load %arg0[%c0_1, %c0_2, %c0_3] : memref<1x64x167xf32, #tpu.memory_space<vmem>>, vector<1x64x167xf32>
    %3 = vector.shape_cast %2 : vector<1x64x167xf32> to vector<64x167xf32>
    %c0_4 = arith.constant 0 : index
    %c0_5 = arith.constant 0 : index
    %4 = vector.load %arg3[%c0_4, %c0_5] : memref<64x256xf32, #tpu.memory_space<vmem>>, vector<64x167xf32>
    tpu.vector_store %arg3[%c0_4, %c0_5], %3 {strides = array<i32>} : memref<64x256xf32, #tpu.memory_space<vmem>>, vector<64x167xf32>,
    %c0_6 = arith.constant 0 : index
    %c0_7 = arith.constant 0 : index
    %5 = vector.load %arg1[%c0_6, %c0_7] : memref<24x64xf32, #tpu.memory_space<vmem>>, vector<24x64xf32>
    %c0_8 = arith.constant 0 : index
    %c0_9 = arith.constant 0 : index
    %6 = vector.load %arg3[%c0_8, %c0_9] : memref<64x256xf32, #tpu.memory_space<vmem>>, vector<64x256xf32>
    %cst_10 = arith.constant dense<0.000000e+00> : vector<24x256xf32>
    %7 = tpu.matmul %5, %6, %cst_10 {dimension_numbers = #tpu.dot_dimension_numbers<[1], [0], [0], [1], [0, 0, 1, 1], [], []>, precision = #tpu.contract_precision<fp32>} : vector<24x64xf32>, vector<64x256xf32>, vector<24x256xf32> -> vector<24x256xf32>
    %8 = vector.extract_strided_slice %7 {offsets = [0, 0], sizes = [8, 256], strides = [1, 1]} : vector<24x256xf32> to vector<8x256xf32>
    %9 = vector.extract_strided_slice %7 {offsets = [8, 0], sizes = [8, 256], strides = [1, 1]} : vector<24x256xf32> to vector<8x256xf32>
    %c255_i32 = arith.constant 255 : i32
    %10 = tpu.dynamic_rotate %9 by %c255_i32 dim 1 : vector<8x256xf32>, i32 -> vector<8x256xf32>
    %11 = arith.addf %8, %10 : vector<8x256xf32>
    %12 = vector.extract_strided_slice %7 {offsets = [16, 0], sizes = [8, 256], strides = [1, 1]} : vector<24x256xf32> to vector<8x256xf32>
    %c254_i32 = arith.constant 254 : i32
    %13 = tpu.dynamic_rotate %12 by %c254_i32 dim 1 : vector<8x256xf32>, i32 -> vector<8x256xf32>
    %14 = arith.addf %11, %13 : vector<8x256xf32>
    %cst_11 = arith.constant 5.000000e-01 : f32
    %15 = vector.broadcast %cst_11 : f32 to vector<8x256xf32>
    %16 = arith.mulf %15, %14 : vector<8x256xf32>
    %cst_12 = arith.constant 0.707106769 : f32
    %17 = vector.broadcast %cst_12 : f32 to vector<8x256xf32>
    %18 = arith.mulf %14, %17 : vector<8x256xf32>
    %19 = math.erf %18 : vector<8x256xf32>
    %cst_13 = arith.constant 1.000000e+00 : f32
    %20 = vector.broadcast %cst_13 : f32 to vector<8x256xf32>
    %21 = arith.addf %19, %20 : vector<8x256xf32>
    %22 = arith.mulf %16, %21 : vector<8x256xf32>
    %23 = vector.extract_strided_slice %22 {offsets = [0, 0], sizes = [7, 165], strides = [1, 1]} : vector<8x256xf32> to vector<7x165xf32>
    %c0_14 = arith.constant 0 : index
    %c0_15 = arith.constant 0 : index
    %c0_16 = arith.constant 0 : index
    %24 = vector.load %arg2[%c0_14, %c0_15, %c0_16] : memref<1x7x165xf32, #tpu.memory_space<vmem>>, vector<1x7x165xf32>
    %25 = vector.shape_cast %24 : vector<1x7x165xf32> to vector<7x165xf32>
    %26 = vector.shape_cast %23 : vector<7x165xf32> to vector<1x7x165xf32>
    tpu.vector_store %arg2[%c0_14, %c0_15, %c0_16], %26 {strides = array<i32>} : memref<1x7x165xf32, #tpu.memory_space<vmem>>, vector<1x7x165xf32>,
    return
  }
}

</mosaic_0001>

<llo_original>
// kernel: conv1d_gelu.1
$region0: #{conv1d_gelu.1}
  #allocation0 [shape = 'u32[]', space=smem, size = 0x4, offset = 0x4, fixed_abs, tag = 'smem constant byte address 0x4 - core index']
  #allocation1 [shape = 'u32[144,128]{1,0:T(1,128)}', space=vmem, size = 0x12000, scoped, tag = 'internal scratch']
  #allocation2 [shape = 'f32[64,256]{1,0:T(8,128)}', space=vmem, size = 0x10000, scoped, tag = 'scratch operand']
  %s0 = inlined_call_operand.hbm [shape: f32[1,64,167], index: 0, kind: input, shape index: {}]
  %s1 = inlined_call_operand.hbm [shape: f32[24,64], index: 1, kind: input, shape index: {}]
  %s2 = inlined_call_operand.vmem [shape: f32[1,7,165], index: 2, kind: output, shape index: {}]
  %s3 = sld [smem:[#allocation0]]
  $region26: #{conv1d_gelu.1} parent=0
    _
  %s5 = ssub.s32 1, %s3
  %s6 = scalar_select 0, %s5, %s3
  $region1: #{conv1d_gelu.1} parent=0
    #allocation3 [shape = 'u8[65536]{0}', space=vmem, size = 0x10000, scoped, tag = 'input window, operand 0, single buffered']
    #allocation4 [shape = 's32[1]{0}', space=sflag, size = 0x4, scoped, tag = 'scoped memory for conv1d_gelu.1']
    #allocation5 [shape = 'u8[12288]{0}', space=vmem, size = 0x3000, scoped, tag = 'input window, operand 1, single buffered']
    #allocation6 [shape = 's32[1]{0}', space=sflag, size = 0x4, scoped, tag = 'scoped memory for conv1d_gelu.1']
    %7 = vsyncpa [#allocation4], 0
    %8 = vsyncpa [#allocation6], 0
    // Predicated region
    $region2: #{conv1d_gelu.1} parent=1 // pred_check
      _
    $region3: #{conv1d_gelu.1} parent=1 // pred_check_branch
      %10 = sbr.rel (0) target = $region5
    $region4: #{conv1d_gelu.1} parent=1 // pred_region
      %s12 = ssub.s32 2048, 2048
      %13 = vsyncadd [#allocation4], %s12
      %s14 = sshll.u32 [#allocation3], 4
      %s15 = int_to_ptr.vmem [resolvable:$true] %s14
      %20 = dma.hbm_to_vmem [thread:$0]  %s0, 2048, %s15, [#allocation4], 256, 256, 16
    $region5: #{conv1d_gelu.1} parent=1 // pred_fallthru
      _
    // Predicated region
    $region6: #{conv1d_gelu.1} parent=1 // pred_check
      _
    $region7: #{conv1d_gelu.1} parent=1 // pred_check_branch
      %22 = sbr.rel (0) target = $region9
    $region8: #{conv1d_gelu.1} parent=1 // pred_region
      %s24 = ssub.s32 384, 384
      %25 = vsyncadd [#allocation6], %s24
      %s26 = sshll.u32 [#allocation5], 4
      %s27 = int_to_ptr.vmem [resolvable:$true] %s26
      %32 = dma.hbm_to_vmem [thread:$0]  %s1, 384, %s27, [#allocation6], 128, 128, 8
    $region9: #{conv1d_gelu.1} parent=1 // pred_fallthru
      _
    // Predicated region
    $region10: #{conv1d_gelu.1} parent=1 // pred_check
      _
    $region11: #{conv1d_gelu.1} parent=1 // pred_check_branch
      %34 = sbr.rel (0) target = $region13
    $region12: #{conv1d_gelu.1} parent=1 // pred_region
      %35 = dma.done [#allocation4], 2048
    $region13: #{conv1d_gelu.1} parent=1 // pred_fallthru
      _
    // Predicated region
    $region14: #{conv1d_gelu.1} parent=1 // pred_check
      _
    $region15: #{conv1d_gelu.1} parent=1 // pred_check_branch
      %37 = sbr.rel (0) target = $region17
    $region16: #{conv1d_gelu.1} parent=1 // pred_region
      %38 = dma.done [#allocation6], 384
    $region17: #{conv1d_gelu.1} parent=1 // pred_fallthru
      _
    %39 = vst [vmem:[#allocation2] sm:$0xff] 0.0
    %40 = vst [vmem:[#allocation2 + $0x8] sm:$0xff] 0.0
    %41 = vst [vmem:[#allocation2 + $0x10] sm:$0xff] 0.0
    %42 = vst [vmem:[#allocation2 + $0x18] sm:$0xff] 0.0
    %43 = vst [vmem:[#allocation2 + $0x20] sm:$0xff] 0.0
    %44 = vst [vmem:[#allocation2 + $0x28] sm:$0xff] 0.0
    %45 = vst [vmem:[#allocation2 + $0x30] sm:$0xff] 0.0
    %46 = vst [vmem:[#allocation2 + $0x38] sm:$0xff] 0.0
    %47 = vst [vmem:[#allocation2 + $0x40] sm:$0xff] 0.0
    %48 = vst [vmem:[#allocation2 + $0x48] sm:$0xff] 0.0
    %49 = vst [vmem:[#allocation2 + $0x50] sm:$0xff] 0.0
    %50 = vst [vmem:[#allocation2 + $0x58] sm:$0xff] 0.0
    %51 = vst [vmem:[#allocation2 + $0x60] sm:$0xff] 0.0
    %52 = vst [vmem:[#allocation2 + $0x68] sm:$0xff] 0.0
    %53 = vst [vmem:[#allocation2 + $0x70] sm:$0xff] 0.0
    %54 = vst [vmem:[#allocation2 + $0x78] sm:$0xff] 0.0
    %v55 = vld [vmem:[#allocation3] sm:$0xff]
    %v56 = vld [vmem:[#allocation3 + $0x8] sm:$0xff]
    %v57 = vld [vmem:[#allocation3 + $0x10] sm:$0xff]
    %v58 = vld [vmem:[#allocation3 + $0x18] sm:$0xff]
    %v59 = vld [vmem:[#allocation3 + $0x20] sm:$0xff]
    %v60 = vld [vmem:[#allocation3 + $0x28] sm:$0xff]
    %v61 = vld [vmem:[#allocation3 + $0x30] sm:$0xff]
    %v62 = vld [vmem:[#allocation3 + $0x38] sm:$0xff]
    %v63 = vld [vmem:[#allocation3 + $0x40] sm:$0xff]
    %v64 = vld [vmem:[#allocation3 + $0x48] sm:$0xff]
    %v65 = vld [vmem:[#allocation3 + $0x50] sm:$0xff]
    %v66 = vld [vmem:[#allocation3 + $0x58] sm:$0xff]
    %v67 = vld [vmem:[#allocation3 + $0x60] sm:$0xff]
    %v68 = vld [vmem:[#allocation3 + $0x68] sm:$0xff]
    %v69 = vld [vmem:[#allocation3 + $0x70] sm:$0xff]
    %v70 = vld [vmem:[#allocation3 + $0x78] sm:$0xff]
    %71 = vst [vmem:[#allocation2] sm:$0xff] %v55
    %vm72 = vcmask 318464
    %73 = vst.msk [vmem:[#allocation2 + $0x8] sm:$0xff] %vm72, %v56
    %74 = vst [vmem:[#allocation2 + $0x10] sm:$0xff] %v57
    %75 = vst.msk [vmem:[#allocation2 + $0x18] sm:$0xff] %vm72, %v58
    %76 = vst [vmem:[#allocation2 + $0x20] sm:$0xff] %v59
    %77 = vst.msk [vmem:[#allocation2 + $0x28] sm:$0xff] %vm72, %v60
    %78 = vst [vmem:[#allocation2 + $0x30] sm:$0xff] %v61
    %79 = vst.msk [vmem:[#allocation2 + $0x38] sm:$0xff] %vm72, %v62
    %80 = vst [vmem:[#allocation2 + $0x40] sm:$0xff] %v63
    %81 = vst.msk [vmem:[#allocation2 + $0x48] sm:$0xff] %vm72, %v64
    %82 = vst [vmem:[#allocation2 + $0x50] sm:$0xff] %v65
    %83 = vst.msk [vmem:[#allocation2 + $0x58] sm:$0xff] %vm72, %v66
    %84 = vst [vmem:[#allocation2 + $0x60] sm:$0xff] %v67
    %85 = vst.msk [vmem:[#allocation2 + $0x68] sm:$0xff] %vm72, %v68
    %86 = vst [vmem:[#allocation2 + $0x70] sm:$0xff] %v69
    %87 = vst.msk [vmem:[#allocation2 + $0x78] sm:$0xff] %vm72, %v70
    %v88 = vld [vmem:[#allocation5] sm:$0xff]
    %v89 = vld [vmem:[#allocation5 + $0x8] sm:$0xff]
    %v90 = vld [vmem:[#allocation5 + $0x10] sm:$0xff]
    %v91 = vld [vmem:[#allocation2] sm:$0xff]
    %v92 = vld [vmem:[#allocation2 + $0x8] sm:$0xff]
    %v93 = vld [vmem:[#allocation2 + $0x10] sm:$0xff]
    %v94 = vld [vmem:[#allocation2 + $0x18] sm:$0xff]
    %v95 = vld [vmem:[#allocation2 + $0x20] sm:$0xff]
    %v96 = vld [vmem:[#allocation2 + $0x28] sm:$0xff]
    %v97 = vld [vmem:[#allocation2 + $0x30] sm:$0xff]
    %v98 = vld [vmem:[#allocation2 + $0x38] sm:$0xff]
    %v99 = vld [vmem:[#allocation2 + $0x40] sm:$0xff]
    %v100 = vld [vmem:[#allocation2 + $0x48] sm:$0xff]
    %v101 = vld [vmem:[#allocation2 + $0x50] sm:$0xff]
    %v102 = vld [vmem:[#allocation2 + $0x58] sm:$0xff]
    %v103 = vld [vmem:[#allocation2 + $0x60] sm:$0xff]
    %v104 = vld [vmem:[#allocation2 + $0x68] sm:$0xff]
    %v105 = vld [vmem:[#allocation2 + $0x70] sm:$0xff]
    %v106 = vld [vmem:[#allocation2 + $0x78] sm:$0xff]
    %vm107 = vcmask 523264
    %v109 = vsel %vm107, %v88, 0
    %v112 = vsel %vm107, %v89, 0
    %v115 = vsel %vm107, %v90, 0
    %117 = vmatprep.subr.mxu0 0.0
    %118 = vmatpush1.msra.mxu0 0.0
    %119 = vmatprep.subr.mxu0 0.0
    %120 = vmatpush1.msra.mxu0 0.0
    %121 = vmatprep.subr.mxu0 0.0
    %122 = vmatpush1.msra.mxu0 0.0
    %123 = vmatprep.subr.mxu0 0.0
    %124 = vmatpush1.msra.mxu0 0.0
    %125 = vmatprep.subr.mxu0 0.0
    %126 = vmatpush1.msra.mxu0 0.0
    %127 = vmatprep.subr.mxu0 0.0
    %128 = vmatpush1.msra.mxu0 0.0
    %129 = vmatprep.subr.mxu0 0.0
    %130 = vmatpush1.msra.mxu0 0.0
    %131 = vmatprep.subr.mxu0 0.0
    %132 = vmatpush1.msra.mxu0 0.0
    %v133 = vand.u32 %v106, 4294901760
    %134 = vmatprep.subr.mxu0 %v133
    %v135 = vand.u32 %v105, 4294901760
    %136 = vmatpush1.msra.mxu0 %v135
    %v137 = vand.u32 %v104, 4294901760
    %138 = vmatprep.subr.mxu0 %v137
    %v139 = vand.u32 %v103, 4294901760
    %140 = vmatpush1.msra.mxu0 %v139
    %v141 = vand.u32 %v102, 4294901760
    %142 = vmatprep.subr.mxu0 %v141
    %v143 = vand.u32 %v101, 4294901760
    %144 = vmatpush1.msra.mxu0 %v143
    %v145 = vand.u32 %v100, 4294901760
    %146 = vmatprep.subr.mxu0 %v145
    %v147 = vand.u32 %v99, 4294901760
    %148 = vmatpush1.msra.mxu0 %v147
    %v149 = vand.u32 %v98, 4294901760
    %150 = vmatprep.subr.mxu0 %v149
    %v151 = vand.u32 %v97, 4294901760
    %152 = vmatpush1.msra.mxu0 %v151
    %v153 = vand.u32 %v96, 4294901760
    %154 = vmatprep.subr.mxu0 %v153
    %v155 = vand.u32 %v95, 4294901760
    %156 = vmatpush1.msra.mxu0 %v155
    %v157 = vand.u32 %v94, 4294901760
    %158 = vmatprep.subr.mxu0 %v157
    %v159 = vand.u32 %v93, 4294901760
    %160 = vmatpush1.msra.mxu0 %v159
    %v161 = vand.u32 %v92, 4294901760
    %162 = vmatprep.subr.mxu0 %v161
    %v163 = vand.u32 %v91, 4294901760
    %164 = vmatpush1.msra.mxu0 %v163
    %165 = vmatprep.subr.mxu0 0.0
    %166 = vmatpush2.msra.mxu0 0.0
    %167 = vmatprep.subr.mxu0 0.0
    %168 = vmatpush2.msra.mxu0 0.0
    %169 = vmatprep.subr.mxu0 0.0
    %170 = vmatpush2.msra.mxu0 0.0
    %171 = vmatprep.subr.mxu0 0.0
    %172 = vmatpush2.msra.mxu0 0.0
    %173 = vmatprep.subr.mxu0 0.0
    %174 = vmatpush2.msra.mxu0 0.0
    %175 = vmatprep.subr.mxu0 0.0
    %176 = vmatpush2.msra.mxu0 0.0
    %177 = vmatprep.subr.mxu0 0.0
    %178 = vmatpush2.msra.mxu0 0.0
    %179 = vmatprep.subr.mxu0 0.0
    %180 = vmatpush2.msra.mxu0 0.0
    %181 = vmatprep.subr.mxu0 0.0
    %182 = vmatpush2.msra.mxu0 0.0
    %183 = vmatprep.subr.mxu0 0.0
    %184 = vmatpush2.msra.mxu0 0.0
    %185 = vmatprep.subr.mxu0 0.0
    %186 = vmatpush2.msra.mxu0 0.0
    %187 = vmatprep.subr.mxu0 0.0
    %188 = vmatpush2.msra.mxu0 0.0
    %189 = vmatprep.subr.mxu0 0.0
    %190 = vmatpush2.msra.mxu0 0.0
    %191 = vmatprep.subr.mxu0 0.0
    %192 = vmatpush2.msra.mxu0 0.0
    %193 = vmatprep.subr.mxu0 0.0
    %194 = vmatpush2.msra.mxu0 0.0
    %195 = vmatprep.subr.mxu0 0.0
    %196 = vmatpush2.msra.mxu0 0.0
    %197 = vmatprep.mubr.f32.mxu0 0.0
    %v198 = vand.u32 %v109, 4294901760
    %v199 = vsub.f32 %v109, %v198
    %v200 = vand.u32 %v199, 4294901760
    %v201 = vsub.f32 %v199, %v200
    %v202 = vand.u32 %v201, 4294901760
    %203 = vmatmul.mubr.f32.gmra.mxu0 %v202
    %v204 = vpop.f32.mrf.mxu0
    %v205 = vadd.f32 0.0, %v204
    %v206 = vpop.f32.mrf.mxu0
    %v207 = vadd.f32 0.0, %v206
    %208 = vmatprep.mubr.f32.mxu0 0.0
    %v209 = vand.u32 %v112, 4294901760
    %v210 = vsub.f32 %v112, %v209
    %v211 = vand.u32 %v210, 4294901760
    %v212 = vsub.f32 %v210, %v211
    %v213 = vand.u32 %v212, 4294901760
    %214 = vmatmul.mubr.f32.gmra.mxu0 %v213
    %v215 = vpop.f32.mrf.mxu0
    %v216 = vadd.f32 0.0, %v215
    %v217 = vpop.f32.mrf.mxu0
    %v218 = vadd.f32 0.0, %v217
    %219 = vmatprep.mubr.f32.mxu0 0.0
    %v220 = vand.u32 %v115, 4294901760
    %v221 = vsub.f32 %v115, %v220
    %v222 = vand.u32 %v221, 4294901760
    %v223 = vsub.f32 %v221, %v222
    %v224 = vand.u32 %v223, 4294901760
    %225 = vmatmul.mubr.f32.gmra.mxu0 %v224
    %v226 = vpop.f32.mrf.mxu0
    %v227 = vadd.f32 0.0, %v226
    %v228 = vpop.f32.mrf.mxu0
    %v229 = vadd.f32 0.0, %v228
    %230 = vdwg.mxu0
    %231 = vmatprep.subr.mxu0 0.0
    %232 = vmatpush1.msra.mxu0 0.0
    %233 = vmatprep.subr.mxu0 0.0
    %234 = vmatpush1.msra.mxu0 0.0
    %235 = vmatprep.subr.mxu0 0.0
    %236 = vmatpush1.msra.mxu0 0.0
    %237 = vmatprep.subr.mxu0 0.0
    %238 = vmatpush1.msra.mxu0 0.0
    %239 = vmatprep.subr.mxu0 0.0
    %240 = vmatpush1.msra.mxu0 0.0
    %241 = vmatprep.subr.mxu0 0.0
    %242 = vmatpush1.msra.mxu0 0.0
    %243 = vmatprep.subr.mxu0 0.0
    %244 = vmatpush1.msra.mxu0 0.0
    %245 = vmatprep.subr.mxu0 0.0
    %246 = vmatpush1.msra.mxu0 0.0
    %v247 = vand.u32 %v106, 4294901760
    %v248 = vsub.f32 %v106, %v247
    %v249 = vand.u32 %v248, 4294901760
    %v250 = vsub.f32 %v248, %v249
    %v251 = vand.u32 %v250, 4294901760
    %252 = vmatprep.subr.mxu0 %v251
    %v253 = vand.u32 %v105, 4294901760
    %v254 = vsub.f32 %v105, %v253
    %v255 = vand.u32 %v254, 4294901760
    %v256 = vsub.f32 %v254, %v255
    %v257 = vand.u32 %v256, 4294901760
    %258 = vmatpush1.msra.mxu0 %v257
    %v259 = vand.u32 %v104, 4294901760
    %v260 = vsub.f32 %v104, %v259
    %v261 = vand.u32 %v260, 4294901760
    %v262 = vsub.f32 %v260, %v261
    %v263 = vand.u32 %v262, 4294901760
    %264 = vmatprep.subr.mxu0 %v263
    %v265 = vand.u32 %v103, 4294901760
    %v266 = vsub.f32 %v103, %v265
    %v267 = vand.u32 %v266, 4294901760
    %v268 = vsub.f32 %v266, %v267
    %v269 = vand.u32 %v268, 4294901760
    %270 = vmatpush1.msra.mxu0 %v269
    %v271 = vand.u32 %v102, 4294901760
    %v272 = vsub.f32 %v102, %v271
    %v273 = vand.u32 %v272, 4294901760
    %v274 = vsub.f32 %v272, %v273
    %v275 = vand.u32 %v274, 4294901760
    %276 = vmatprep.subr.mxu0 %v275
    %v277 = vand.u32 %v101, 4294901760
    %v278 = vsub.f32 %v101, %v277
    %v279 = vand.u32 %v278, 4294901760
    %v280 = vsub.f32 %v278, %v279
    %v281 = vand.u32 %v280, 4294901760
    %282 = vmatpush1.msra.mxu0 %v281
    %v283 = vand.u32 %v100, 4294901760
    %v284 = vsub.f32 %v100, %v283
    %v285 = vand.u32 %v284, 4294901760
    %v286 = vsub.f32 %v284, %v285
    %v287 = vand.u32 %v286, 4294901760
    %288 = vmatprep.subr.mxu0 %v287
    %v289 = vand.u32 %v99, 4294901760
    %v290 = vsub.f32 %v99, %v289
    %v291 = vand.u32 %v290, 4294901760
    %v292 = vsub.f32 %v290, %v291
    %v293 = vand.u32 %v292, 4294901760
    %294 = vmatpush1.msra.mxu0 %v293
    %v295 = vand.u32 %v98, 4294901760
    %v296 = vsub.f32 %v98, %v295
    %v297 = vand.u32 %v296, 4294901760
    %v298 = vsub.f32 %v296, %v297
    %v299 = vand.u32 %v298, 4294901760
    %300 = vmatprep.subr.mxu0 %v299
    %v301 = vand.u32 %v97, 4294901760
    %v302 = vsub.f32 %v97, %v301
    %v303 = vand.u32 %v302, 4294901760
    %v304 = vsub.f32 %v302, %v303
    %v305 = vand.u32 %v304, 4294901760
    %306 = vmatpush1.msra.mxu0 %v305
    %v307 = vand.u32 %v96, 4294901760
    %v308 = vsub.f32 %v96, %v307
    %v309 = vand.u32 %v308, 4294901760
    %v310 = vsub.f32 %v308, %v309
    %v311 = vand.u32 %v310, 4294901760
    %312 = vmatprep.subr.mxu0 %v311
    %v313 = vand.u32 %v95, 4294901760
    %v314 = vsub.f32 %v95, %v313
    %v315 = vand.u32 %v314, 4294901760
    %v316 = vsub.f32 %v314, %v315
    %v317 = vand.u32 %v316, 4294901760
    %318 = vmatpush1.msra.mxu0 %v317
    %v319 = vand.u32 %v94, 4294901760
    %v320 = vsub.f32 %v94, %v319
    %v321 = vand.u32 %v320, 4294901760
    %v322 = vsub.f32 %v320, %v321
    %v323 = vand.u32 %v322, 4294901760
    %324 = vmatprep.subr.mxu0 %v323
    %v325 = vand.u32 %v93, 4294901760
    %v326 = vsub.f32 %v93, %v325
    %v327 = vand.u32 %v326, 4294901760
    %v328 = vsub.f32 %v326, %v327
    %v329 = vand.u32 %v328, 4294901760
    %330 = vmatpush1.msra.mxu0 %v329
    %v331 = vand.u32 %v92, 4294901760
    %v332 = vsub.f32 %v92, %v331
    %v333 = vand.u32 %v332, 4294901760
    %v334 = vsub.f32 %v332, %v333
    %v335 = vand.u32 %v334, 4294901760
    %336 = vmatprep.subr.mxu0 %v335
    %v337 = vand.u32 %v91, 4294901760
    %v338 = vsub.f32 %v91, %v337
    %v339 = vand.u32 %v338, 4294901760
    %v340 = vsub.f32 %v338, %v339
    %v341 = vand.u32 %v340, 4294901760
    %342 = vmatpush1.msra.mxu0 %v341
    %343 = vmatprep.subr.mxu0 0.0
    %344 = vmatpush2.msra.mxu0 0.0
    %345 = vmatprep.subr.mxu0 0.0
    %346 = vmatpush2.msra.mxu0 0.0
    %347 = vmatprep.subr.mxu0 0.0
    %348 = vmatpush2.msra.mxu0 0.0
    %349 = vmatprep.subr.mxu0 0.0
    %350 = vmatpush2.msra.mxu0 0.0
    %351 = vmatprep.subr.mxu0 0.0
    %352 = vmatpush2.msra.mxu0 0.0
    %353 = vmatprep.subr.mxu0 0.0
    %354 = vmatpush2.msra.mxu0 0.0
    %355 = vmatprep.subr.mxu0 0.0
    %356 = vmatpush2.msra.mxu0 0.0
    %357 = vmatprep.subr.mxu0 0.0
    %358 = vmatpush2.msra.mxu0 0.0
    %359 = vmatprep.subr.mxu0 0.0
    %360 = vmatpush2.msra.mxu0 0.0
    %361 = vmatprep.subr.mxu0 0.0
    %362 = vmatpush2.msra.mxu0 0.0
    %363 = vmatprep.subr.mxu0 0.0
    %364 = vmatpush2.msra.mxu0 0.0
    %365 = vmatprep.subr.mxu0 0.0
    %366 = vmatpush2.msra.mxu0 0.0
    %367 = vmatprep.subr.mxu0 0.0
    %368 = vmatpush2.msra.mxu0 0.0
    %369 = vmatprep.subr.mxu0 0.0
    %370 = vmatpush2.msra.mxu0 0.0
    %371 = vmatprep.subr.mxu0 0.0
    %372 = vmatpush2.msra.mxu0 0.0
    %373 = vmatprep.subr.mxu0 0.0
    %374 = vmatpush2.msra.mxu0 0.0
    %375 = vmatprep.mubr.f32.mxu0 0.0
    %v376 = vand.u32 %v109, 4294901760
    %377 = vmatmul.mubr.f32.gmra.mxu0 %v376
    %v378 = vpop.f32.mrf.mxu0
    %v379 = vadd.f32 %v205, %v378
    %v380 = vpop.f32.mrf.mxu0
    %v381 = vadd.f32 %v207, %v380
    %382 = vmatprep.mubr.f32.mxu0 0.0
    %v383 = vand.u32 %v112, 4294901760
    %384 = vmatmul.mubr.f32.gmra.mxu0 %v383
    %v385 = vpop.f32.mrf.mxu0
    %v386 = vadd.f32 %v216, %v385
    %v387 = vpop.f32.mrf.mxu0
    %v388 = vadd.f32 %v218, %v387
    %389 = vmatprep.mubr.f32.mxu0 0.0
    %v390 = vand.u32 %v115, 4294901760
    %391 = vmatmul.mubr.f32.gmra.mxu0 %v390
    %v392 = vpop.f32.mrf.mxu0
    %v393 = vadd.f32 %v227, %v392
    %v394 = vpop.f32.mrf.mxu0
    %v395 = vadd.f32 %v229, %v394
    %396 = vdwg.mxu0
    %397 = vmatprep.subr.mxu0 0.0
    %398 = vmatpush1.msra.mxu0 0.0
    %399 = vmatprep.subr.mxu0 0.0
    %400 = vmatpush1.msra.mxu0 0.0
    %401 = vmatprep.subr.mxu0 0.0
    %402 = vmatpush1.msra.mxu0 0.0
    %403 = vmatprep.subr.mxu0 0.0
    %404 = vmatpush1.msra.mxu0 0.0
    %405 = vmatprep.subr.mxu0 0.0
    %406 = vmatpush1.msra.mxu0 0.0
    %407 = vmatprep.subr.mxu0 0.0
    %408 = vmatpush1.msra.mxu0 0.0
    %409 = vmatprep.subr.mxu0 0.0
    %410 = vmatpush1.msra.mxu0 0.0
    %411 = vmatprep.subr.mxu0 0.0
    %412 = vmatpush1.msra.mxu0 0.0
    %v413 = vand.u32 %v106, 4294901760
    %v414 = vsub.f32 %v106, %v413
    %415 = vmatprep.subr.mxu0 %v414
    %v416 = vand.u32 %v105, 4294901760
    %v417 = vsub.f32 %v105, %v416
    %418 = vmatpush1.msra.mxu0 %v417
    %v419 = vand.u32 %v104, 4294901760
    %v420 = vsub.f32 %v104, %v419
    %421 = vmatprep.subr.mxu0 %v420
    %v422 = vand.u32 %v103, 4294901760
    %v423 = vsub.f32 %v103, %v422
    %424 = vmatpush1.msra.mxu0 %v423
    %v425 = vand.u32 %v102, 4294901760
    %v426 = vsub.f32 %v102, %v425
    %427 = vmatprep.subr.mxu0 %v426
    %v428 = vand.u32 %v101, 4294901760
    %v429 = vsub.f32 %v101, %v428
    %430 = vmatpush1.msra.mxu0 %v429
    %v431 = vand.u32 %v100, 4294901760
    %v432 = vsub.f32 %v100, %v431
    %433 = vmatprep.subr.mxu0 %v432
    %v434 = vand.u32 %v99, 4294901760
    %v435 = vsub.f32 %v99, %v434
    %436 = vmatpush1.msra.mxu0 %v435
    %v437 = vand.u32 %v98, 4294901760
    %v438 = vsub.f32 %v98, %v437
    %439 = vmatprep.subr.mxu0 %v438
    %v440 = vand.u32 %v97, 4294901760
    %v441 = vsub.f32 %v97, %v440
    %442 = vmatpush1.msra.mxu0 %v441
    %v443 = vand.u32 %v96, 4294901760
    %v444 = vsub.f32 %v96, %v443
    %445 = vmatprep.subr.mxu0 %v444
    %v446 = vand.u32 %v95, 4294901760
    %v447 = vsub.f32 %v95, %v446
    %448 = vmatpush1.msra.mxu0 %v447
    %v449 = vand.u32 %v94, 4294901760
    %v450 = vsub.f32 %v94, %v449
    %451 = vmatprep.subr.mxu0 %v450
    %v452 = vand.u32 %v93, 4294901760
    %v453 = vsub.f32 %v93, %v452
    %454 = vmatpush1.msra.mxu0 %v453
    %v455 = vand.u32 %v92, 4294901760
    %v456 = vsub.f32 %v92, %v455
    %457 = vmatprep.subr.mxu0 %v456
    %v458 = vand.u32 %v91, 4294901760
    %v459 = vsub.f32 %v91, %v458
    %460 = vmatpush1.msra.mxu0 %v459
    %461 = vmatprep.subr.mxu0 0.0
    %462 = vmatpush2.msra.mxu0 0.0
    %463 = vmatprep.subr.mxu0 0.0
    %464 = vmatpush2.msra.mxu0 0.0
    %465 = vmatprep.subr.mxu0 0.0
    %466 = vmatpush2.msra.mxu0 0.0
    %467 = vmatprep.subr.mxu0 0.0
    %468 = vmatpush2.msra.mxu0 0.0
    %469 = vmatprep.subr.mxu0 0.0
    %470 = vmatpush2.msra.mxu0 0.0
    %471 = vmatprep.subr.mxu0 0.0
    %472 = vmatpush2.msra.mxu0 0.0
    %473 = vmatprep.subr.mxu0 0.0
    %474 = vmatpush2.msra.mxu0 0.0
    %475 = vmatprep.subr.mxu0 0.0
    %476 = vmatpush2.msra.mxu0 0.0
    %477 = vmatprep.subr.mxu0 0.0
    %478 = vmatpush2.msra.mxu0 0.0
    %479 = vmatprep.subr.mxu0 0.0
    %480 = vmatpush2.msra.mxu0 0.0
    %481 = vmatprep.subr.mxu0 0.0
    %482 = vmatpush2.msra.mxu0 0.0
    %483 = vmatprep.subr.mxu0 0.0
    %484 = vmatpush2.msra.mxu0 0.0
    %485 = vmatprep.subr.mxu0 0.0
    %486 = vmatpush2.msra.mxu0 0.0
    %487 = vmatprep.subr.mxu0 0.0
    %488 = vmatpush2.msra.mxu0 0.0
    %489 = vmatprep.subr.mxu0 0.0
    %490 = vmatpush2.msra.mxu0 0.0
    %491 = vmatprep.subr.mxu0 0.0
    %492 = vmatpush2.msra.mxu0 0.0
    %493 = vmatprep.mubr.f32.mxu0 0.0
    %v494 = vand.u32 %v109, 4294901760
    %v495 = vsub.f32 %v109, %v494
    %496 = vmatmul.mubr.f32.gmra.mxu0 %v495
    %v497 = vpop.f32.mrf.mxu0
    %v498 = vadd.f32 %v379, %v497
    %v499 = vpop.f32.mrf.mxu0
    %v500 = vadd.f32 %v381, %v499
    %501 = vmatprep.mubr.f32.mxu0 0.0
    %v502 = vand.u32 %v112, 4294901760
    %v503 = vsub.f32 %v112, %v502
    %504 = vmatmul.mubr.f32.gmra.mxu0 %v503
    %v505 = vpop.f32.mrf.mxu0
    %v506 = vadd.f32 %v386, %v505
    %v507 = vpop.f32.mrf.mxu0
    %v508 = vadd.f32 %v388, %v507
    %509 = vmatprep.mubr.f32.mxu0 0.0
    %v510 = vand.u32 %v115, 4294901760
    %v511 = vsub.f32 %v115, %v510
    %512 = vmatmul.mubr.f32.gmra.mxu0 %v511
    %v513 = vpop.f32.mrf.mxu0
    %v514 = vadd.f32 %v393, %v513
    %v515 = vpop.f32.mrf.mxu0
    %v516 = vadd.f32 %v395, %v515
    %517 = vdwg.mxu0
    %518 = vmatprep.subr.mxu0 0.0
    %519 = vmatpush1.msra.mxu0 0.0
    %520 = vmatprep.subr.mxu0 0.0
    %521 = vmatpush1.msra.mxu0 0.0
    %522 = vmatprep.subr.mxu0 0.0
    %523 = vmatpush1.msra.mxu0 0.0
    %524 = vmatprep.subr.mxu0 0.0
    %525 = vmatpush1.msra.mxu0 0.0
    %526 = vmatprep.subr.mxu0 0.0
    %527 = vmatpush1.msra.mxu0 0.0
    %528 = vmatprep.subr.mxu0 0.0
    %529 = vmatpush1.msra.mxu0 0.0
    %530 = vmatprep.subr.mxu0 0.0
    %531 = vmatpush1.msra.mxu0 0.0
    %532 = vmatprep.subr.mxu0 0.0
    %533 = vmatpush1.msra.mxu0 0.0
    %v534 = vand.u32 %v106, 4294901760
    %535 = vmatprep.subr.mxu0 %v534
    %v536 = vand.u32 %v105, 4294901760
    %537 = vmatpush1.msra.mxu0 %v536
    %v538 = vand.u32 %v104, 4294901760
    %539 = vmatprep.subr.mxu0 %v538
    %v540 = vand.u32 %v103, 4294901760
    %541 = vmatpush1.msra.mxu0 %v540
    %v542 = vand.u32 %v102, 4294901760
    %543 = vmatprep.subr.mxu0 %v542
    %v544 = vand.u32 %v101, 4294901760
    %545 = vmatpush1.msra.mxu0 %v544
    %v546 = vand.u32 %v100, 4294901760
    %547 = vmatprep.subr.mxu0 %v546
    %v548 = vand.u32 %v99, 4294901760
    %549 = vmatpush1.msra.mxu0 %v548
    %v550 = vand.u32 %v98, 4294901760
    %551 = vmatprep.subr.mxu0 %v550
    %v552 = vand.u32 %v97, 4294901760
    %553 = vmatpush1.msra.mxu0 %v552
    %v554 = vand.u32 %v96, 4294901760
    %555 = vmatprep.subr.mxu0 %v554
    %v556 = vand.u32 %v95, 4294901760
    %557 = vmatpush1.msra.mxu0 %v556
    %v558 = vand.u32 %v94, 4294901760
    %559 = vmatprep.subr.mxu0 %v558
    %v560 = vand.u32 %v93, 4294901760
    %561 = vmatpush1.msra.mxu0 %v560
    %v562 = vand.u32 %v92, 4294901760
    %563 = vmatprep.subr.mxu0 %v562
    %v564 = vand.u32 %v91, 4294901760
    %565 = vmatpush1.msra.mxu0 %v564
    %566 = vmatprep.subr.mxu0 0.0
    %567 = vmatpush2.msra.mxu0 0.0
    %568 = vmatprep.subr.mxu0 0.0
    %569 = vmatpush2.msra.mxu0 0.0
    %570 = vmatprep.subr.mxu0 0.0
    %571 = vmatpush2.msra.mxu0 0.0
    %572 = vmatprep.subr.mxu0 0.0
    %573 = vmatpush2.msra.mxu0 0.0
    %574 = vmatprep.subr.mxu0 0.0
    %575 = vmatpush2.msra.mxu0 0.0
    %576 = vmatprep.subr.mxu0 0.0
    %577 = vmatpush2.msra.mxu0 0.0
    %578 = vmatprep.subr.mxu0 0.0
    %579 = vmatpush2.msra.mxu0 0.0
    %580 = vmatprep.subr.mxu0 0.0
    %581 = vmatpush2.msra.mxu0 0.0
    %582 = vmatprep.subr.mxu0 0.0
    %583 = vmatpush2.msra.mxu0 0.0
    %584 = vmatprep.subr.mxu0 0.0
    %585 = vmatpush2.msra.mxu0 0.0
    %586 = vmatprep.subr.mxu0 0.0
    %587 = vmatpush2.msra.mxu0 0.0
    %588 = vmatprep.subr.mxu0 0.0
    %589 = vmatpush2.msra.mxu0 0.0
    %590 = vmatprep.subr.mxu0 0.0
    %591 = vmatpush2.msra.mxu0 0.0
    %592 = vmatprep.subr.mxu0 0.0
    %593 = vmatpush2.msra.mxu0 0.0
    %594 = vmatprep.subr.mxu0 0.0
    %595 = vmatpush2.msra.mxu0 0.0
    %596 = vmatprep.subr.mxu0 0.0
    %597 = vmatpush2.msra.mxu0 0.0
    %598 = vmatprep.mubr.f32.mxu0 0.0
    %v599 = vand.u32 %v109, 4294901760
    %v600 = vsub.f32 %v109, %v599
    %v601 = vand.u32 %v600, 4294901760
    %602 = vmatmul.mubr.f32.gmra.mxu0 %v601
    %v603 = vpop.f32.mrf.mxu0
    %v604 = vadd.f32 %v498, %v603
    %v605 = vpop.f32.mrf.mxu0
    %v606 = vadd.f32 %v500, %v605
    %607 = vmatprep.mubr.f32.mxu0 0.0
    %v608 = vand.u32 %v112, 4294901760
    %v609 = vsub.f32 %v112, %v608
    %v610 = vand.u32 %v609, 4294901760
    %611 = vmatmul.mubr.f32.gmra.mxu0 %v610
    %v612 = vpop.f32.mrf.mxu0
    %v613 = vadd.f32 %v506, %v612
    %v614 = vpop.f32.mrf.mxu0
    %v615 = vadd.f32 %v508, %v614
    %616 = vmatprep.mubr.f32.mxu0 0.0
    %v617 = vand.u32 %v115, 4294901760
    %v618 = vsub.f32 %v115, %v617
    %v619 = vand.u32 %v618, 4294901760
    %620 = vmatmul.mubr.f32.gmra.mxu0 %v619
    %v621 = vpop.f32.mrf.mxu0
    %v622 = vadd.f32 %v514, %v621
    %v623 = vpop.f32.mrf.mxu0
    %v624 = vadd.f32 %v516, %v623
    %625 = vdwg.mxu0
    %626 = vmatprep.subr.mxu0 0.0
    %627 = vmatpush1.msra.mxu0 0.0
    %628 = vmatprep.subr.mxu0 0.0
    %629 = vmatpush1.msra.mxu0 0.0
    %630 = vmatprep.subr.mxu0 0.0
    %631 = vmatpush1.msra.mxu0 0.0
    %632 = vmatprep.subr.mxu0 0.0
    %633 = vmatpush1.msra.mxu0 0.0
    %634 = vmatprep.subr.mxu0 0.0
    %635 = vmatpush1.msra.mxu0 0.0
    %636 = vmatprep.subr.mxu0 0.0
    %637 = vmatpush1.msra.mxu0 0.0
    %638 = vmatprep.subr.mxu0 0.0
    %639 = vmatpush1.msra.mxu0 0.0
    %640 = vmatprep.subr.mxu0 0.0
    %641 = vmatpush1.msra.mxu0 0.0
    %v642 = vand.u32 %v106, 4294901760
    %v643 = vsub.f32 %v106, %v642
    %v644 = vand.u32 %v643, 4294901760
    %645 = vmatprep.subr.mxu0 %v644
    %v646 = vand.u32 %v105, 4294901760
    %v647 = vsub.f32 %v105, %v646
    %v648 = vand.u32 %v647, 4294901760
    %649 = vmatpush1.msra.mxu0 %v648
    %v650 = vand.u32 %v104, 4294901760
    %v651 = vsub.f32 %v104, %v650
    %v652 = vand.u32 %v651, 4294901760
    %653 = vmatprep.subr.mxu0 %v652
    %v654 = vand.u32 %v103, 4294901760
    %v655 = vsub.f32 %v103, %v654
    %v656 = vand.u32 %v655, 4294901760
    %657 = vmatpush1.msra.mxu0 %v656
    %v658 = vand.u32 %v102, 4294901760
    %v659 = vsub.f32 %v102, %v658
    %v660 = vand.u32 %v659, 4294901760
    %661 = vmatprep.subr.mxu0 %v660
    %v662 = vand.u32 %v101, 4294901760
    %v663 = vsub.f32 %v101, %v662
    %v664 = vand.u32 %v663, 4294901760
    %665 = vmatpush1.msra.mxu0 %v664
    %v666 = vand.u32 %v100, 4294901760
    %v667 = vsub.f32 %v100, %v666
    %v668 = vand.u32 %v667, 4294901760
    %669 = vmatprep.subr.mxu0 %v668
    %v670 = vand.u32 %v99, 4294901760
    %v671 = vsub.f32 %v99, %v670
    %v672 = vand.u32 %v671, 4294901760
    %673 = vmatpush1.msra.mxu0 %v672
    %v674 = vand.u32 %v98, 4294901760
    %v675 = vsub.f32 %v98, %v674
    %v676 = vand.u32 %v675, 4294901760
    %677 = vmatprep.subr.mxu0 %v676
    %v678 = vand.u32 %v97, 4294901760
    %v679 = vsub.f32 %v97, %v678
    %v680 = vand.u32 %v679, 4294901760
    %681 = vmatpush1.msra.mxu0 %v680
    %v682 = vand.u32 %v96, 4294901760
    %v683 = vsub.f32 %v96, %v682
    %v684 = vand.u32 %v683, 4294901760
    %685 = vmatprep.subr.mxu0 %v684
    %v686 = vand.u32 %v95, 4294901760
    %v687 = vsub.f32 %v95, %v686
    %v688 = vand.u32 %v687, 4294901760
    %689 = vmatpush1.msra.mxu0 %v688
    %v690 = vand.u32 %v94, 4294901760
    %v691 = vsub.f32 %v94, %v690
    %v692 = vand.u32 %v691, 4294901760
    %693 = vmatprep.subr.mxu0 %v692
    %v694 = vand.u32 %v93, 4294901760
    %v695 = vsub.f32 %v93, %v694
    %v696 = vand.u32 %v695, 4294901760
    %697 = vmatpush1.msra.mxu0 %v696
    %v698 = vand.u32 %v92, 4294901760
    %v699 = vsub.f32 %v92, %v698
    %v700 = vand.u32 %v699, 4294901760
    %701 = vmatprep.subr.mxu0 %v700
    %v702 = vand.u32 %v91, 4294901760
    %v703 = vsub.f32 %v91, %v702
    %v704 = vand.u32 %v703, 4294901760
    %705 = vmatpush1.msra.mxu0 %v704
    %706 = vmatprep.subr.mxu0 0.0
    %707 = vmatpush2.msra.mxu0 0.0
    %708 = vmatprep.subr.mxu0 0.0
    %709 = vmatpush2.msra.mxu0 0.0
    %710 = vmatprep.subr.mxu0 0.0
    %711 = vmatpush2.msra.mxu0 0.0
    %712 = vmatprep.subr.mxu0 0.0
    %713 = vmatpush2.msra.mxu0 0.0
    %714 = vmatprep.subr.mxu0 0.0
    %715 = vmatpush2.msra.mxu0 0.0
    %716 = vmatprep.subr.mxu0 0.0
    %717 = vmatpush2.msra.mxu0 0.0
    %718 = vmatprep.subr.mxu0 0.0
    %719 = vmatpush2.msra.mxu0 0.0
    %720 = vmatprep.subr.mxu0 0.0
    %721 = vmatpush2.msra.mxu0 0.0
    %722 = vmatprep.subr.mxu0 0.0
    %723 = vmatpush2.msra.mxu0 0.0
    %724 = vmatprep.subr.mxu0 0.0
    %725 = vmatpush2.msra.mxu0 0.0
    %726 = vmatprep.subr.mxu0 0.0
    %727 = vmatpush2.msra.mxu0 0.0
    %728 = vmatprep.subr.mxu0 0.0
    %729 = vmatpush2.msra.mxu0 0.0
    %730 = vmatprep.subr.mxu0 0.0
    %731 = vmatpush2.msra.mxu0 0.0
    %732 = vmatprep.subr.mxu0 0.0
    %733 = vmatpush2.msra.mxu0 0.0
    %734 = vmatprep.subr.mxu0 0.0
    %735 = vmatpush2.msra.mxu0 0.0
    %736 = vmatprep.subr.mxu0 0.0
    %737 = vmatpush2.msra.mxu0 0.0
    %738 = vmatprep.mubr.f32.mxu0 0.0
    %v739 = vand.u32 %v109, 4294901760
    %740 = vmatmul.mubr.f32.gmra.mxu0 %v739
    %v741 = vpop.f32.mrf.mxu0
    %v742 = vadd.f32 %v604, %v741
    %v743 = vpop.f32.mrf.mxu0
    %v744 = vadd.f32 %v606, %v743
    %745 = vmatprep.mubr.f32.mxu0 0.0
    %v746 = vand.u32 %v112, 4294901760
    %747 = vmatmul.mubr.f32.gmra.mxu0 %v746
    %v748 = vpop.f32.mrf.mxu0
    %v749 = vadd.f32 %v613, %v748
    %v750 = vpop.f32.mrf.mxu0
    %v751 = vadd.f32 %v615, %v750
    %752 = vmatprep.mubr.f32.mxu0 0.0
    %v753 = vand.u32 %v115, 4294901760
    %754 = vmatmul.mubr.f32.gmra.mxu0 %v753
    %v755 = vpop.f32.mrf.mxu0
    %v756 = vadd.f32 %v622, %v755
    %v757 = vpop.f32.mrf.mxu0
    %v758 = vadd.f32 %v624, %v757
    %759 = vdwg.mxu0
    %760 = vmatprep.subr.mxu0 0.0
    %761 = vmatpush1.msra.mxu0 0.0
    %762 = vmatprep.subr.mxu0 0.0
    %763 = vmatpush1.msra.mxu0 0.0
    %764 = vmatprep.subr.mxu0 0.0
    %765 = vmatpush1.msra.mxu0 0.0
    %766 = vmatprep.subr.mxu0 0.0
    %767 = vmatpush1.msra.mxu0 0.0
    %768 = vmatprep.subr.mxu0 0.0
    %769 = vmatpush1.msra.mxu0 0.0
    %770 = vmatprep.subr.mxu0 0.0
    %771 = vmatpush1.msra.mxu0 0.0
    %772 = vmatprep.subr.mxu0 0.0
    %773 = vmatpush1.msra.mxu0 0.0
    %774 = vmatprep.subr.mxu0 0.0
    %775 = vmatpush1.msra.mxu0 0.0
    %v776 = vand.u32 %v106, 4294901760
    %777 = vmatprep.subr.mxu0 %v776
    %v778 = vand.u32 %v105, 4294901760
    %779 = vmatpush1.msra.mxu0 %v778
    %v780 = vand.u32 %v104, 4294901760
    %781 = vmatprep.subr.mxu0 %v780
    %v782 = vand.u32 %v103, 4294901760
    %783 = vmatpush1.msra.mxu0 %v782
    %v784 = vand.u32 %v102, 4294901760
    %785 = vmatprep.subr.mxu0 %v784
    %v786 = vand.u32 %v101, 4294901760
    %787 = vmatpush1.msra.mxu0 %v786
    %v788 = vand.u32 %v100, 4294901760
    %789 = vmatprep.subr.mxu0 %v788
    %v790 = vand.u32 %v99, 4294901760
    %791 = vmatpush1.msra.mxu0 %v790
    %v792 = vand.u32 %v98, 4294901760
    %793 = vmatprep.subr.mxu0 %v792
    %v794 = vand.u32 %v97, 4294901760
    %795 = vmatpush1.msra.mxu0 %v794
    %v796 = vand.u32 %v96, 4294901760
    %797 = vmatprep.subr.mxu0 %v796
    %v798 = vand.u32 %v95, 4294901760
    %799 = vmatpush1.msra.mxu0 %v798
    %v800 = vand.u32 %v94, 4294901760
    %801 = vmatprep.subr.mxu0 %v800
    %v802 = vand.u32 %v93, 4294901760
    %803 = vmatpush1.msra.mxu0 %v802
    %v804 = vand.u32 %v92, 4294901760
    %805 = vmatprep.subr.mxu0 %v804
    %v806 = vand.u32 %v91, 4294901760
    %807 = vmatpush1.msra.mxu0 %v806
    %808 = vmatprep.subr.mxu0 0.0
    %809 = vmatpush2.msra.mxu0 0.0
    %810 = vmatprep.subr.mxu0 0.0
    %811 = vmatpush2.msra.mxu0 0.0
    %812 = vmatprep.subr.mxu0 0.0
    %813 = vmatpush2.msra.mxu0 0.0
    %814 = vmatprep.subr.mxu0 0.0
    %815 = vmatpush2.msra.mxu0 0.0
    %816 = vmatprep.subr.mxu0 0.0
    %817 = vmatpush2.msra.mxu0 0.0
    %818 = vmatprep.subr.mxu0 0.0
    %819 = vmatpush2.msra.mxu0 0.0
    %820 = vmatprep.subr.mxu0 0.0
    %821 = vmatpush2.msra.mxu0 0.0
    %822 = vmatprep.subr.mxu0 0.0
    %823 = vmatpush2.msra.mxu0 0.0
    %824 = vmatprep.subr.mxu0 0.0
    %825 = vmatpush2.msra.mxu0 0.0
    %826 = vmatprep.subr.mxu0 0.0
    %827 = vmatpush2.msra.mxu0 0.0
    %828 = vmatprep.subr.mxu0 0.0
    %829 = vmatpush2.msra.mxu0 0.0
    %830 = vmatprep.subr.mxu0 0.0
    %831 = vmatpush2.msra.mxu0 0.0
    %832 = vmatprep.subr.mxu0 0.0
    %833 = vmatpush2.msra.mxu0 0.0
    %834 = vmatprep.subr.mxu0 0.0
    %835 = vmatpush2.msra.mxu0 0.0
    %836 = vmatprep.subr.mxu0 0.0
    %837 = vmatpush2.msra.mxu0 0.0
    %838 = vmatprep.subr.mxu0 0.0
    %839 = vmatpush2.msra.mxu0 0.0
    %840 = vmatprep.mubr.f32.mxu0 0.0
    %v841 = vand.u32 %v109, 4294901760
    %842 = vmatmul.mubr.f32.gmra.mxu0 %v841
    %v843 = vpop.f32.mrf.mxu0
    %v844 = vadd.f32 %v742, %v843
    %v845 = vpop.f32.mrf.mxu0
    %v846 = vadd.f32 %v744, %v845
    %847 = vmatprep.mubr.f32.mxu0 0.0
    %v848 = vand.u32 %v112, 4294901760
    %849 = vmatmul.mubr.f32.gmra.mxu0 %v848
    %v850 = vpop.f32.mrf.mxu0
    %v851 = vadd.f32 %v749, %v850
    %v852 = vpop.f32.mrf.mxu0
    %v853 = vadd.f32 %v751, %v852
    %854 = vmatprep.mubr.f32.mxu0 0.0
    %v855 = vand.u32 %v115, 4294901760
    %856 = vmatmul.mubr.f32.gmra.mxu0 %v855
    %v857 = vpop.f32.mrf.mxu0
    %v858 = vadd.f32 %v756, %v857
    %v859 = vpop.f32.mrf.mxu0
    %v860 = vadd.f32 %v758, %v859
    %861 = vdwg.mxu0
    %862 = vrot.lane.b32.xlu0 %v851, 127
    %v863 = vpop.permute.xlu0 %862
    %864 = vrot.lane.b32.xlu0 %v853, 127
    %v865 = vpop.permute.xlu0 %864
    %v866 = vlaneseq
    %v867 = vand.u32 %v866, 127
    %vm868 = vcmp.lt.s32.totalorder %v867, 127
    %v869 = vsel %vm868, %v863, %v865
    %v870 = vsel %vm868, %v865, %v863
    %v871 = vadd.f32 %v844, %v869
    %v872 = vadd.f32 %v846, %v870
    %873 = vrot.lane.b32.xlu0 %v858, 126
    %v874 = vpop.permute.xlu0 %873
    %875 = vrot.lane.b32.xlu0 %v860, 126
    %v876 = vpop.permute.xlu0 %875
    %vm877 = vcmp.lt.s32.totalorder %v867, 126
    %v878 = vsel %vm877, %v874, %v876
    %v879 = vsel %vm877, %v876, %v874
    %v880 = vadd.f32 %v871, %v878
    %v881 = vadd.f32 %v872, %v879
    %v882 = vmul.f32 %v880, 0.5
    %v883 = vmul.f32 %v881, 0.5
    %v884 = vmul.f32 %v880, 0.70710677
    %v885 = vmul.f32 %v881, 0.70710677
    %v886 = verf.f32.pop %v884
    %v887 = verf.f32.pop %v885
    %v888 = vadd.f32 %v886, 1.0
    %v889 = vadd.f32 %v887, 1.0
    %v890 = vmul.f32 %v882, %v888
    %v891 = vmul.f32 %v883, %v889
    %892 = vst [vmem:[%s2] sm:$0x7f] %v890
    %vm893 = vcmask 301056
    %894 = vst.msk [vmem:[%s2 + $0x8] sm:$0x7f] %vm893, %v891
    // Predicated region
    $region18: #{conv1d_gelu.1} parent=1 // pred_check
      _
    $region19: #{conv1d_gelu.1} parent=1 // pred_check_branch
      %896 = sbr.rel (0) target = $region21
    $region20: #{conv1d_gelu.1} parent=1 // pred_region
      _
    $region21: #{conv1d_gelu.1} parent=1 // pred_fallthru
      _
    // Predicated region
    $region22: #{conv1d_gelu.1} parent=1 // pred_check
      _
    $region23: #{conv1d_gelu.1} parent=1 // pred_check_branch
      %898 = sbr.rel (0) target = $region25
    $region24: #{conv1d_gelu.1} parent=1 // pred_region
      _
    $region25: #{conv1d_gelu.1} parent=1 // pred_fallthru
      _
    %899 = vsyncpa [#allocation4], 1
    %900 = vsyncpa [#allocation6], 1

</llo_original>
